<compile_context>
chip_gen: v7x
topology: tpu7x:2x2x1
jax: 0.10.0
libtpu: 0.0.40
codegen_flags: <defaults>
</compile_context>

<pallas_src>
import jax
import jax.numpy as jnp
from jax import lax
from jax.experimental import pallas as pl
from jax.experimental.pallas import tpu as pltpu


def _round_up(x, m):
    return (x + m - 1) // m * m


def _default_tile_l():
    """128 on v5e (128x128 MXU), 256 on v6e/v7x (256-wide MXU)."""
    try:
        kind = jax.devices()[0].device_kind.lower()
    except Exception:
        kind = ""
    if "v5 lite" in kind or "v5e" in kind or "v5litepod" in kind:
        return 128
    return 256


def _sample_crop(key, size, scale):
    # TODO(synk): torch.empty(1).uniform_ / torch.randint RNG streams cannot be
    # reproduced bit-exactly; deterministic jax.random draws (same distribution)
    # are used instead.
    k_frac, k_start = jax.random.split(key)
    frac = jax.random.uniform(k_frac, (), jnp.float32, scale[0], scale[1])
    tgt = jnp.clip(jnp.floor(jnp.float32(size) * frac).astype(jnp.int32), 1, size)
    start = jax.random.randint(k_start, (), 0, size - tgt + 1, dtype=jnp.int32)
    return tgt, start


def _source_taps(tgt, size, n):
    """Exact left-tap index i0 (int32) and fractional weight lam (f32) for n
    output columns, align_corners=False, clipped like PyTorch linear interp.

    src_j = (j + 0.5) * tgt/size - 0.5 = ((2j+1)*tgt - size) / (2*size)
    Integer arithmetic keeps i0 exact and lam's only error is one f32 divide.
    """
    # TODO(synk): (2j+1)*tgt overflows int32 for size >~ 32k; needs x64 there.
    j = jnp.arange(n, dtype=jnp.int32)
    den = jnp.int32(2 * size)
    p = (2 * j + 1) * tgt - jnp.int32(size)
    q = p // den                      # floor division (handles p < 0)
    r = p % den                       # in [0, den)
    i0 = jnp.clip(q, 0, tgt - 1)
    lam = jnp.where((q >= 0) & (q <= tgt - 2),
                    r.astype(jnp.float32) / den.astype(jnp.float32),
                    jnp.float32(0.0))
    return i0, lam


def _rrc1d_kernel(wb0_ref, x0_ref, x1_ref, s_ref, o_ref):
    # wb0_ref is the SMEM scalar-prefetch table; only the index_maps need it.
    del wb0_ref
    tl = o_ref.shape[-1]
    s = s_ref[...]                                            # (1, tl) window-local src pos
    # One iota / one difference shared by both half-window hats (VALU saver).
    k = lax.broadcasted_iota(jnp.int32, (tl, tl), 0).astype(jnp.float32)
    d = k - s                                                 # f32 on all chips
    # hat(row k, col j) = max(0, 1 - |k - s_j|): exactly (1-lam) on floor(s_j)
    # and lam on floor(s_j)+1, zero elsewhere.
    m0 = jnp.maximum(1.0 - jnp.abs(d), 0.0).astype(jnp.bfloat16)          # rows [0, tl)
    m1 = jnp.maximum(1.0 - jnp.abs(d + float(tl)), 0.0).astype(jnp.bfloat16)  # rows [tl, 2tl)
    x0 = x0_ref[...].astype(jnp.bfloat16)
    x1 = x1_ref[...].astype(jnp.bfloat16)
    acc = jnp.dot(x0, m0, preferred_element_type=jnp.float32)
    acc = acc + jnp.dot(x1, m1, preferred_element_type=jnp.float32)
    o_ref[...] = acc.astype(o_ref.dtype)


def random_resized_crop_1d(signal, *, size, scale=(0.08, 1.0), key, tile_l=None):
    """Forward pass of RandomResizedCrop1D on a (C, L) signal.  Fully jittable."""
    C, L = signal.shape
    assert L == size, "module assumes signal_length == self.size"
    if tile_l is None:
        tile_l = _default_tile_l()

    in_bytes = jnp.dtype(signal.dtype).itemsize
    sub = 8 * max(4 // in_bytes, 1)                # 8 sublanes f32, 16 bf16
    c_pad0 = _round_up(C, sub)
    c_tile = min(256, c_pad0)                      # tile C: bounds VMEM (v7x 64 MiB), feeds megacore
    C_pad = _round_up(c_pad0, c_tile)
    L_pad = _round_up(size, tile_l)
    num_t = L_pad // tile_l
    num_c = C_pad // c_tile
    # TODO(synk): for genuinely tiny C a VPU 2-tap gather path would beat the MXU;
    # the MXU/hat path is kept for generality.

    tgt, start = _sample_crop(key, size, scale)
    i0, lam = _source_taps(tgt, size, L_pad)       # crop-local left tap / weight
    g0 = start + i0                                # left tap in signal coordinates

    # Window blocks for output tile t: blocks [wb0, wb0+1] of the padded signal.
    # tgt <= size => source stride <= 1, so across a tile i0 advances by at most
    # tile_l-1; first tap's in-block offset <= tile_l-1; +1 for the right tap
    # => every tap lands in [wb0*tile_l, wb0*tile_l + 2*tile_l)  (invariant).
    wb0 = g0[::tile_l] // tile_l                   # (num_t,) int32, scalar-prefetched
    off = jnp.repeat(wb0 * tile_l, tile_l)
    s_local = ((g0 - off).astype(jnp.float32) + lam).reshape(1, L_pad)

    # One extra zero block so wb0+1 is always a valid block index.
    x_p = jnp.zeros((C_pad, L_pad + tile_l), signal.dtype).at[:C, :size].set(signal)

    grid_spec = pltpu.PrefetchScalarGridSpec(
        num_scalar_prefetch=1,
        grid=(num_c, num_t),
        in_specs=[
            pl.BlockSpec((c_tile, tile_l), lambda c, t, w0: (c, w0[t])),      # window blk 0
            pl.BlockSpec((c_tile, tile_l), lambda c, t, w0: (c, w0[t] + 1)),  # window blk 1
            pl.BlockSpec((1, tile_l), lambda c, t, w0: (0, t)),               # local src pos
        ],
        out_specs=pl.BlockSpec((c_tile, tile_l), lambda c, t, w0: (c, t)),
    )

    out_p = pl.pallas_call(
        _rrc1d_kernel,
        grid_spec=grid_spec,
        out_shape=jax.ShapeDtypeStruct((C_pad, L_pad), signal.dtype),
        compiler_params=pltpu.CompilerParams(
            dimension_semantics=("parallel", "parallel"),
            vmem_limit_bytes=32 * 1024 * 1024,
        ),
        cost_estimate=pl.CostEstimate(
            flops=num_c * num_t * 4 * c_tile * tile_l * tile_l,
            transcendentals=0,
            bytes_accessed=num_c * num_t
            * (3 * c_tile * tile_l * in_bytes + 4 * tile_l),
        ),
    )(wb0, x_p, x_p, s_local)

    return out_p[:C, :size]


def _reference(signal, size, scale, key):
    """Pure-JAX (f32) reference using the identical traced crop parameters."""
    tgt, start = _sample_crop(key, size, scale)
    j = jnp.arange(size, dtype=jnp.float32)
    tgt_f = tgt.astype(jnp.float32)
    s = jnp.clip((j + 0.5) * tgt_f / jnp.float32(size) - 0.5, 0.0, tgt_f - 1.0)
    i0 = jnp.floor(s).astype(jnp.int32)
    i1 = jnp.minimum(i0 + 1, tgt - 1)
    lam = s - i0.astype(jnp.float32)
    a = signal[:, start + i0]
    b = signal[:, start + i1]
    return ((1.0 - lam)[None, :] * a + lam[None, :] * b).astype(signal.dtype)


if __name__ == "__main__":
    root = jax.random.PRNGKey(0)
    k_sig, k_crop = jax.random.split(root)

    C, size = 4, 16
    signal = jax.random.normal(k_sig, (C, size), dtype=jnp.float32)

    fn = jax.jit(random_resized_crop_1d, static_argnames=("size", "scale", "tile_l"))
    out = jax.block_until_ready(fn(signal, size=size, scale=(0.08, 1.0), key=k_crop))

    assert out.shape == (C, size) and out.dtype == signal.dtype

    ref = _reference(signal, size, (0.08, 1.0), k_crop)
    # Tolerance sized to the bf16 MXU operands (~2^-8 relative); tap indexing
    # itself is exact-integer, so a genuine indexing bug would still trip this.
    assert jnp.allclose(out, ref, atol=2e-2, rtol=2e-2), "Pallas output != reference"

    print("KERNEL_OK")
</pallas_src>

<mosaic_0001>
module attributes {stable_mosaic.version = 11 : i64} {
  func.func @_rrc1d_kernel(%arg0: i32, %arg1: i32, %arg2: memref<1xi32, #tpu.memory_space<smem>>, %arg3: memref<8x256xf32, #tpu.memory_space<vmem>>, %arg4: memref<8x256xf32, #tpu.memory_space<vmem>>, %arg5: memref<1x256xf32, #tpu.memory_space<vmem>>, %arg6: memref<8x256xf32, #tpu.memory_space<vmem>>) attributes {dimension_semantics = [#tpu.dimension_semantics<parallel>, #tpu.dimension_semantics<parallel>], iteration_bounds = array<i64: 1, 1>, scalar_prefetch = 1 : i64, scratch_operands = 0 : i64, tpu.core_type = #tpu.core_type<tc>, window_params = [{transform_indices = @transform_0, window_bounds = array<i64: 8, 256>}, {transform_indices = @transform_1, window_bounds = array<i64: 8, 256>}, {transform_indices = @transform_2, window_bounds = array<i64: 1, 256>}, {transform_indices = @transform_3, window_bounds = array<i64: 8, 256>}]} {
    %c0 = arith.constant 0 : index
    %c0_0 = arith.constant 0 : index
    %0 = vector.load %arg5[%c0, %c0_0] : memref<1x256xf32, #tpu.memory_space<vmem>>, vector<1x256xf32>
    %1 = tpu.iota {dimensions = array<i32: 0>} : vector<256x256xi32>
    %2 = arith.sitofp %1 : vector<256x256xi32> to vector<256x256xf32>
    %3 = vector.broadcast %0 : vector<1x256xf32> to vector<256x256xf32>
    %4 = arith.subf %2, %3 : vector<256x256xf32>
    %5 = math.absf %4 : vector<256x256xf32>
    %cst = arith.constant 1.000000e+00 : f32
    %6 = vector.broadcast %cst : f32 to vector<256x256xf32>
    %7 = arith.subf %6, %5 : vector<256x256xf32>
    %cst_1 = arith.constant 0.000000e+00 : f32
    %8 = vector.broadcast %cst_1 : f32 to vector<256x256xf32>
    %9 = arith.maximumf %7, %8 : vector<256x256xf32>
    %10 = arith.truncf %9 : vector<256x256xf32> to vector<256x256xbf16>
    %cst_2 = arith.constant 2.560000e+02 : f32
    %11 = vector.broadcast %cst_2 : f32 to vector<256x256xf32>
    %12 = arith.addf %4, %11 : vector<256x256xf32>
    %13 = math.absf %12 : vector<256x256xf32>
    %cst_3 = arith.constant 1.000000e+00 : f32
    %14 = vector.broadcast %cst_3 : f32 to vector<256x256xf32>
    %15 = arith.subf %14, %13 : vector<256x256xf32>
    %cst_4 = arith.constant 0.000000e+00 : f32
    %16 = vector.broadcast %cst_4 : f32 to vector<256x256xf32>
    %17 = arith.maximumf %15, %16 : vector<256x256xf32>
    %18 = arith.truncf %17 : vector<256x256xf32> to vector<256x256xbf16>
    %c0_5 = arith.constant 0 : index
    %c0_6 = arith.constant 0 : index
    %19 = vector.load %arg3[%c0_5, %c0_6] : memref<8x256xf32, #tpu.memory_space<vmem>>, vector<8x256xf32>
    %20 = arith.truncf %19 : vector<8x256xf32> to vector<8x256xbf16>
    %c0_7 = arith.constant 0 : index
    %c0_8 = arith.constant 0 : index
    %21 = vector.load %arg4[%c0_7, %c0_8] : memref<8x256xf32, #tpu.memory_space<vmem>>, vector<8x256xf32>
    %22 = arith.truncf %21 : vector<8x256xf32> to vector<8x256xbf16>
    %cst_9 = arith.constant dense<0.000000e+00> : vector<8x256xf32>
    %23 = tpu.matmul %20, %10, %cst_9 {dimension_numbers = #tpu.dot_dimension_numbers<[1], [0], [0], [1], [0, 0, 1, 1], [], []>} : vector<8x256xbf16>, vector<256x256xbf16>, vector<8x256xf32> -> vector<8x256xf32>
    %cst_10 = arith.constant dense<0.000000e+00> : vector<8x256xf32>
    %24 = tpu.matmul %22, %18, %cst_10 {dimension_numbers = #tpu.dot_dimension_numbers<[1], [0], [0], [1], [0, 0, 1, 1], [], []>} : vector<8x256xbf16>, vector<256x256xbf16>, vector<8x256xf32> -> vector<8x256xf32>
    %25 = arith.addf %23, %24 : vector<8x256xf32>
    %c0_11 = arith.constant 0 : index
    %c0_12 = arith.constant 0 : index
    %26 = vector.load %arg6[%c0_11, %c0_12] : memref<8x256xf32, #tpu.memory_space<vmem>>, vector<8x256xf32>
    tpu.vector_store %arg6[%c0_11, %c0_12], %25 {strides = array<i32>} : memref<8x256xf32, #tpu.memory_space<vmem>>, vector<8x256xf32>,
    return
  }
  func.func @transform_0(%arg0: i32, %arg1: i32, %arg2: memref<1xi32, #tpu.memory_space<smem>>) -> (i32, i32) {
    %0 = arith.index_cast %arg1 : i32 to index
    %1 = memref.load %arg2[%0] : memref<1xi32, #tpu.memory_space<smem>>
    %c0_i32 = arith.constant 0 : i32
    return %arg0, %1 : i32, i32
  }
  func.func @transform_1(%arg0: i32, %arg1: i32, %arg2: memref<1xi32, #tpu.memory_space<smem>>) -> (i32, i32) {
    %0 = arith.index_cast %arg1 : i32 to index
    %1 = memref.load %arg2[%0] : memref<1xi32, #tpu.memory_space<smem>>
    %c1_i32 = arith.constant 1 : i32
    %2 = arith.addi %1, %c1_i32 : i32
    %c0_i32 = arith.constant 0 : i32
    return %arg0, %2 : i32, i32
  }
  func.func @transform_2(%arg0: i32, %arg1: i32, %arg2: memref<1xi32, #tpu.memory_space<smem>>) -> (i32, i32) {
    %c0_i32 = arith.constant 0 : i32
    %c0_i32_0 = arith.constant 0 : i32
    return %c0_i32, %arg1 : i32, i32
  }
  func.func @transform_3(%arg0: i32, %arg1: i32, %arg2: memref<1xi32, #tpu.memory_space<smem>>) -> (i32, i32) {
    %c0_i32 = arith.constant 0 : i32
    return %arg0, %arg1 : i32, i32
  }
}

</mosaic_0001>

<llo_original>
// kernel: random_resized_crop_1d.1
$region0: #{random_resized_crop_1d.1}
  #allocation0 [shape = 'u32[]', space=smem, size = 0x4, offset = 0x4, fixed_abs, tag = 'smem constant byte address 0x4 - core index']
  #allocation1 [shape = 'u32[144,128]{1,0:T(1,128)}', space=vmem, size = 0x12000, scoped, tag = 'internal scratch']
  #allocation2 [shape = 's32[1]{0}', space=sflag, size = 0x4, scoped, tag = 'scoped memory for random_resized_crop_1d.1']
  #allocation3 [shape = 's32[1]{0:T(128)S(6)}', space=smem, size = 0x200, scoped, tag = 'prefetched SMEM operand 0']
  %s0 = inlined_call_operand.<no memory space> [shape: s32[1], index: 0, kind: input, shape index: {}]
  %s1 = inlined_call_operand.vmem [shape: f32[8,512], index: 1, kind: input, shape index: {}, may-alias: {1,2}]
  %s2 = inlined_call_operand.vmem [shape: f32[8,512], index: 2, kind: input, shape index: {}, may-alias: {1,2}]
  %s3 = inlined_call_operand.vmem [shape: f32[1,256], index: 3, kind: input, shape index: {}]
  %s4 = inlined_call_operand.vmem [shape: f32[8,256], index: 4, kind: output, shape index: {}]
  %s5 = sld [smem:[#allocation0]]
  $region22: #{random_resized_crop_1d.1} parent=0
    _
  %s7 = ssub.s32 1, %s5
  %s8 = scalar_select 0, %s7, %s5
  %9 = sst [smem:[#allocation3]] %s0
  // Predicated region
  $region2: #{random_resized_crop_1d.1} parent=0 // pred_check
    _
  $region3: #{random_resized_crop_1d.1} parent=0 // pred_check_branch
    %11 = sbr.rel (0) target = $region5
  $region4: #{random_resized_crop_1d.1} parent=0 // pred_region
    %s12 = sld [smem:[#allocation3]]
    %s13 = smul.u32 2, %s12
    %p14 = scmp.lt.s32.totalorder %s13, 3
    %s15 = scalar_select %p14, %s13, 3
    %s16 = smul.addr %s15, 8
    %s17 = scalar_lea.vmem %s1, %s16
    %s18 = sld [smem:[#allocation3]]
    %s19 = smul.u32 2, %s18
  $region5: #{random_resized_crop_1d.1} parent=0 // pred_fallthru
    _
  // Predicated region
  $region6: #{random_resized_crop_1d.1} parent=0 // pred_check
    _
  $region7: #{random_resized_crop_1d.1} parent=0 // pred_check_branch
    %21 = sbr.rel (0) target = $region9
  $region8: #{random_resized_crop_1d.1} parent=0 // pred_region
    %s22 = sld [smem:[#allocation3]]
    %s23 = sadd.s32 %s22, 1
    %s24 = smul.u32 2, %s23
    %p25 = scmp.lt.s32.totalorder %s24, 3
    %s26 = scalar_select %p25, %s24, 3
    %s27 = smul.addr %s26, 8
    %s28 = scalar_lea.vmem %s2, %s27
    %s29 = sld [smem:[#allocation3]]
    %s30 = sadd.s32 %s29, 1
    %s31 = smul.u32 2, %s30
  $region9: #{random_resized_crop_1d.1} parent=0 // pred_fallthru
    _
  // Predicated region
  $region10: #{random_resized_crop_1d.1} parent=0 // pred_check
    _
  $region11: #{random_resized_crop_1d.1} parent=0 // pred_check_branch
    %33 = sbr.rel (0) target = $region13
  $region12: #{random_resized_crop_1d.1} parent=0 // pred_region
    _
  $region13: #{random_resized_crop_1d.1} parent=0 // pred_fallthru
    _
  %s34 = sld [smem:[#allocation3]]
  %s35 = smul.u32 2, %s34
  %p36 = scmp.lt.s32.totalorder %s35, 3
  %s37 = scalar_select %p36, %s35, 3
  %s38 = smul.addr %s37, 8
  %s39 = scalar_lea.vmem %s1, %s38
  %s40 = sld [smem:[#allocation3]]
  %s41 = sadd.s32 %s40, 1
  %s42 = smul.u32 2, %s41
  %p43 = scmp.lt.s32.totalorder %s42, 3
  %s44 = scalar_select %p43, %s42, 3
  %s45 = smul.addr %s44, 8
  %s46 = scalar_lea.vmem %s2, %s45
  %s47 = sld [smem:[#allocation3]]
  %s48 = smul.u32 2, %s47
  %p49 = scmp.lt.s32.totalorder %s48, 3
  %s50 = scalar_select %p49, %s48, 3
  %s51 = smul.addr %s50, 8
  %s52 = scalar_lea.vmem %s1, %s51
  %s53 = sld [smem:[#allocation3]]
  %s54 = smul.u32 2, %s53
  %s55 = sld [smem:[#allocation3]]
  %s56 = sadd.s32 %s55, 1
  %s57 = smul.u32 2, %s56
  %p58 = scmp.lt.s32.totalorder %s57, 3
  %s59 = scalar_select %p58, %s57, 3
  %s60 = smul.addr %s59, 8
  %s61 = scalar_lea.vmem %s2, %s60
  %s62 = sld [smem:[#allocation3]]
  %s63 = sadd.s32 %s62, 1
  %s64 = smul.u32 2, %s63
  %v65 = vld [vmem:[%s3] sm:$0x3]
  %v66 = vlaneseq
  %v67 = vshrl.u32 %v66, 7
  %v68 = vadd.s32 %v67, 8
  %v69 = vadd.s32 %v67, 16
  %v70 = vadd.s32 %v67, 24
  %v71 = vadd.s32 %v67, 32
  %v72 = vadd.s32 %v67, 40
  %v73 = vadd.s32 %v67, 48
  %v74 = vadd.s32 %v67, 56
  %v75 = vadd.s32 %v67, 64
  %v76 = vadd.s32 %v67, 72
  %v77 = vadd.s32 %v67, 80
  %v78 = vadd.s32 %v67, 88
  %v79 = vadd.s32 %v67, 96
  %v80 = vadd.s32 %v67, 104
  %v81 = vadd.s32 %v67, 112
  %v82 = vadd.s32 %v67, 120
  %v83 = vadd.s32 %v67, 128
  %v84 = vadd.s32 %v67, 136
  %v85 = vadd.s32 %v67, 144
  %v86 = vadd.s32 %v67, 152
  %v87 = vadd.s32 %v67, 160
  %v88 = vadd.s32 %v67, 168
  %v89 = vadd.s32 %v67, 176
  %v90 = vadd.s32 %v67, 184
  %v91 = vadd.s32 %v67, 192
  %v92 = vadd.s32 %v67, 200
  %v93 = vadd.s32 %v67, 208
  %v94 = vadd.s32 %v67, 216
  %v95 = vadd.s32 %v67, 224
  %v96 = vadd.s32 %v67, 232
  %v97 = vadd.s32 %v67, 240
  %v98 = vadd.s32 %v67, 248
  %v99 = vcvt.s32.f32 %v67
  %v100 = vcvt.s32.f32 %v68
  %v101 = vcvt.s32.f32 %v69
  %v102 = vcvt.s32.f32 %v70
  %v103 = vcvt.s32.f32 %v71
  %v104 = vcvt.s32.f32 %v72
  %v105 = vcvt.s32.f32 %v73
  %v106 = vcvt.s32.f32 %v74
  %v107 = vcvt.s32.f32 %v75
  %v108 = vcvt.s32.f32 %v76
  %v109 = vcvt.s32.f32 %v77
  %v110 = vcvt.s32.f32 %v78
  %v111 = vcvt.s32.f32 %v79
  %v112 = vcvt.s32.f32 %v80
  %v113 = vcvt.s32.f32 %v81
  %v114 = vcvt.s32.f32 %v82
  %v115 = vcvt.s32.f32 %v83
  %v116 = vcvt.s32.f32 %v84
  %v117 = vcvt.s32.f32 %v85
  %v118 = vcvt.s32.f32 %v86
  %v119 = vcvt.s32.f32 %v87
  %v120 = vcvt.s32.f32 %v88
  %v121 = vcvt.s32.f32 %v89
  %v122 = vcvt.s32.f32 %v90
  %v123 = vcvt.s32.f32 %v91
  %v124 = vcvt.s32.f32 %v92
  %v125 = vcvt.s32.f32 %v93
  %v126 = vcvt.s32.f32 %v94
  %v127 = vcvt.s32.f32 %v95
  %v128 = vcvt.s32.f32 %v96
  %v129 = vcvt.s32.f32 %v97
  %v130 = vcvt.s32.f32 %v98
  %v132 = vlaneseq
  %v133 = vshrl.u32 %v132, 7
  %v134 = vsub.s32 0, %v133
  %v135 = vrot.slane %v65, %v134
  %v136 = vlaneseq
  %v137 = vshrl.u32 %v136, 7
  %v138 = vsub.s32 1, %v137
  %v139 = vrot.slane %v65, %v138
  %v142 = vsub.f32 %v99, %v135
  %v143 = vsub.f32 %v99, %v139
  %v144 = vsub.f32 %v100, %v135
  %v145 = vsub.f32 %v100, %v139
  %v146 = vsub.f32 %v101, %v135
  %v147 = vsub.f32 %v101, %v139
  %v148 = vsub.f32 %v102, %v135
  %v149 = vsub.f32 %v102, %v139
  %v150 = vsub.f32 %v103, %v135
  %v151 = vsub.f32 %v103, %v139
  %v152 = vsub.f32 %v104, %v135
  %v153 = vsub.f32 %v104, %v139
  %v154 = vsub.f32 %v105, %v135
  %v155 = vsub.f32 %v105, %v139
  %v156 = vsub.f32 %v106, %v135
  %v157 = vsub.f32 %v106, %v139
  %v158 = vsub.f32 %v107, %v135
  %v159 = vsub.f32 %v107, %v139
  %v160 = vsub.f32 %v108, %v135
  %v161 = vsub.f32 %v108, %v139
  %v162 = vsub.f32 %v109, %v135
  %v163 = vsub.f32 %v109, %v139
  %v164 = vsub.f32 %v110, %v135
  %v165 = vsub.f32 %v110, %v139
  %v166 = vsub.f32 %v111, %v135
  %v167 = vsub.f32 %v111, %v139
  %v168 = vsub.f32 %v112, %v135
  %v169 = vsub.f32 %v112, %v139
  %v170 = vsub.f32 %v113, %v135
  %v171 = vsub.f32 %v113, %v139
  %v172 = vsub.f32 %v114, %v135
  %v173 = vsub.f32 %v114, %v139
  %v174 = vsub.f32 %v115, %v135
  %v175 = vsub.f32 %v115, %v139
  %v176 = vsub.f32 %v116, %v135
  %v177 = vsub.f32 %v116, %v139
  %v178 = vsub.f32 %v117, %v135
  %v179 = vsub.f32 %v117, %v139
  %v180 = vsub.f32 %v118, %v135
  %v181 = vsub.f32 %v118, %v139
  %v182 = vsub.f32 %v119, %v135
  %v183 = vsub.f32 %v119, %v139
  %v184 = vsub.f32 %v120, %v135
  %v185 = vsub.f32 %v120, %v139
  %v186 = vsub.f32 %v121, %v135
  %v187 = vsub.f32 %v121, %v139
  %v188 = vsub.f32 %v122, %v135
  %v189 = vsub.f32 %v122, %v139
  %v190 = vsub.f32 %v123, %v135
  %v191 = vsub.f32 %v123, %v139
  %v192 = vsub.f32 %v124, %v135
  %v193 = vsub.f32 %v124, %v139
  %v194 = vsub.f32 %v125, %v135
  %v195 = vsub.f32 %v125, %v139
  %v196 = vsub.f32 %v126, %v135
  %v197 = vsub.f32 %v126, %v139
  %v198 = vsub.f32 %v127, %v135
  %v199 = vsub.f32 %v127, %v139
  %v200 = vsub.f32 %v128, %v135
  %v201 = vsub.f32 %v128, %v139
  %v202 = vsub.f32 %v129, %v135
  %v203 = vsub.f32 %v129, %v139
  %v204 = vsub.f32 %v130, %v135
  %v205 = vsub.f32 %v130, %v139
  %v206 = vand.u32 2147483647, %v142
  %v207 = vand.u32 2147483647, %v143
  %v208 = vand.u32 2147483647, %v144
  %v209 = vand.u32 2147483647, %v145
  %v210 = vand.u32 2147483647, %v146
  %v211 = vand.u32 2147483647, %v147
  %v212 = vand.u32 2147483647, %v148
  %v213 = vand.u32 2147483647, %v149
  %v214 = vand.u32 2147483647, %v150
  %v215 = vand.u32 2147483647, %v151
  %v216 = vand.u32 2147483647, %v152
  %v217 = vand.u32 2147483647, %v153
  %v218 = vand.u32 2147483647, %v154
  %v219 = vand.u32 2147483647, %v155
  %v220 = vand.u32 2147483647, %v156
  %v221 = vand.u32 2147483647, %v157
  %v222 = vand.u32 2147483647, %v158
  %v223 = vand.u32 2147483647, %v159
  %v224 = vand.u32 2147483647, %v160
  %v225 = vand.u32 2147483647, %v161
  %v226 = vand.u32 2147483647, %v162
  %v227 = vand.u32 2147483647, %v163
  %v228 = vand.u32 2147483647, %v164
  %v229 = vand.u32 2147483647, %v165
  %v230 = vand.u32 2147483647, %v166
  %v231 = vand.u32 2147483647, %v167
  %v232 = vand.u32 2147483647, %v168
  %v233 = vand.u32 2147483647, %v169
  %v234 = vand.u32 2147483647, %v170
  %v235 = vand.u32 2147483647, %v171
  %v236 = vand.u32 2147483647, %v172
  %v237 = vand.u32 2147483647, %v173
  %v238 = vand.u32 2147483647, %v174
  %v239 = vand.u32 2147483647, %v175
  %v240 = vand.u32 2147483647, %v176
  %v241 = vand.u32 2147483647, %v177
  %v242 = vand.u32 2147483647, %v178
  %v243 = vand.u32 2147483647, %v179
  %v244 = vand.u32 2147483647, %v180
  %v245 = vand.u32 2147483647, %v181
  %v246 = vand.u32 2147483647, %v182
  %v247 = vand.u32 2147483647, %v183
  %v248 = vand.u32 2147483647, %v184
  %v249 = vand.u32 2147483647, %v185
  %v250 = vand.u32 2147483647, %v186
  %v251 = vand.u32 2147483647, %v187
  %v252 = vand.u32 2147483647, %v188
  %v253 = vand.u32 2147483647, %v189
  %v254 = vand.u32 2147483647, %v190
  %v255 = vand.u32 2147483647, %v191
  %v256 = vand.u32 2147483647, %v192
  %v257 = vand.u32 2147483647, %v193
  %v258 = vand.u32 2147483647, %v194
  %v259 = vand.u32 2147483647, %v195
  %v260 = vand.u32 2147483647, %v196
  %v261 = vand.u32 2147483647, %v197
  %v262 = vand.u32 2147483647, %v198
  %v263 = vand.u32 2147483647, %v199
  %v264 = vand.u32 2147483647, %v200
  %v265 = vand.u32 2147483647, %v201
  %v266 = vand.u32 2147483647, %v202
  %v267 = vand.u32 2147483647, %v203
  %v268 = vand.u32 2147483647, %v204
  %v269 = vand.u32 2147483647, %v205
  %v270 = vsub.f32 1.0, %v206
  %v271 = vsub.f32 1.0, %v207
  %v272 = vsub.f32 1.0, %v208
  %v273 = vsub.f32 1.0, %v209
  %v274 = vsub.f32 1.0, %v210
  %v275 = vsub.f32 1.0, %v211
  %v276 = vsub.f32 1.0, %v212
  %v277 = vsub.f32 1.0, %v213
  %v278 = vsub.f32 1.0, %v214
  %v279 = vsub.f32 1.0, %v215
  %v280 = vsub.f32 1.0, %v216
  %v281 = vsub.f32 1.0, %v217
  %v282 = vsub.f32 1.0, %v218
  %v283 = vsub.f32 1.0, %v219
  %v284 = vsub.f32 1.0, %v220
  %v285 = vsub.f32 1.0, %v221
  %v286 = vsub.f32 1.0, %v222
  %v287 = vsub.f32 1.0, %v223
  %v288 = vsub.f32 1.0, %v224
  %v289 = vsub.f32 1.0, %v225
  %v290 = vsub.f32 1.0, %v226
  %v291 = vsub.f32 1.0, %v227
  %v292 = vsub.f32 1.0, %v228
  %v293 = vsub.f32 1.0, %v229
  %v294 = vsub.f32 1.0, %v230
  %v295 = vsub.f32 1.0, %v231
  %v296 = vsub.f32 1.0, %v232
  %v297 = vsub.f32 1.0, %v233
  %v298 = vsub.f32 1.0, %v234
  %v299 = vsub.f32 1.0, %v235
  %v300 = vsub.f32 1.0, %v236
  %v301 = vsub.f32 1.0, %v237
  %v302 = vsub.f32 1.0, %v238
  %v303 = vsub.f32 1.0, %v239
  %v304 = vsub.f32 1.0, %v240
  %v305 = vsub.f32 1.0, %v241
  %v306 = vsub.f32 1.0, %v242
  %v307 = vsub.f32 1.0, %v243
  %v308 = vsub.f32 1.0, %v244
  %v309 = vsub.f32 1.0, %v245
  %v310 = vsub.f32 1.0, %v246
  %v311 = vsub.f32 1.0, %v247
  %v312 = vsub.f32 1.0, %v248
  %v313 = vsub.f32 1.0, %v249
  %v314 = vsub.f32 1.0, %v250
  %v315 = vsub.f32 1.0, %v251
  %v316 = vsub.f32 1.0, %v252
  %v317 = vsub.f32 1.0, %v253
  %v318 = vsub.f32 1.0, %v254
  %v319 = vsub.f32 1.0, %v255
  %v320 = vsub.f32 1.0, %v256
  %v321 = vsub.f32 1.0, %v257
  %v322 = vsub.f32 1.0, %v258
  %v323 = vsub.f32 1.0, %v259
  %v324 = vsub.f32 1.0, %v260
  %v325 = vsub.f32 1.0, %v261
  %v326 = vsub.f32 1.0, %v262
  %v327 = vsub.f32 1.0, %v263
  %v328 = vsub.f32 1.0, %v264
  %v329 = vsub.f32 1.0, %v265
  %v330 = vsub.f32 1.0, %v266
  %v331 = vsub.f32 1.0, %v267
  %v332 = vsub.f32 1.0, %v268
  %v333 = vsub.f32 1.0, %v269
  %v334 = vmax.f32 %v270, 0.0
  %v335 = vmax.f32 %v271, 0.0
  %v336 = vmax.f32 %v272, 0.0
  %v337 = vmax.f32 %v273, 0.0
  %v338 = vmax.f32 %v274, 0.0
  %v339 = vmax.f32 %v275, 0.0
  %v340 = vmax.f32 %v276, 0.0
  %v341 = vmax.f32 %v277, 0.0
  %v342 = vmax.f32 %v278, 0.0
  %v343 = vmax.f32 %v279, 0.0
  %v344 = vmax.f32 %v280, 0.0
  %v345 = vmax.f32 %v281, 0.0
  %v346 = vmax.f32 %v282, 0.0
  %v347 = vmax.f32 %v283, 0.0
  %v348 = vmax.f32 %v284, 0.0
  %v349 = vmax.f32 %v285, 0.0
  %v350 = vmax.f32 %v286, 0.0
  %v351 = vmax.f32 %v287, 0.0
  %v352 = vmax.f32 %v288, 0.0
  %v353 = vmax.f32 %v289, 0.0
  %v354 = vmax.f32 %v290, 0.0
  %v355 = vmax.f32 %v291, 0.0
  %v356 = vmax.f32 %v292, 0.0
  %v357 = vmax.f32 %v293, 0.0
  %v358 = vmax.f32 %v294, 0.0
  %v359 = vmax.f32 %v295, 0.0
  %v360 = vmax.f32 %v296, 0.0
  %v361 = vmax.f32 %v297, 0.0
  %v362 = vmax.f32 %v298, 0.0
  %v363 = vmax.f32 %v299, 0.0
  %v364 = vmax.f32 %v300, 0.0
  %v365 = vmax.f32 %v301, 0.0
  %v366 = vmax.f32 %v302, 0.0
  %v367 = vmax.f32 %v303, 0.0
  %v368 = vmax.f32 %v304, 0.0
  %v369 = vmax.f32 %v305, 0.0
  %v370 = vmax.f32 %v306, 0.0
  %v371 = vmax.f32 %v307, 0.0
  %v372 = vmax.f32 %v308, 0.0
  %v373 = vmax.f32 %v309, 0.0
  %v374 = vmax.f32 %v310, 0.0
  %v375 = vmax.f32 %v311, 0.0
  %v376 = vmax.f32 %v312, 0.0
  %v377 = vmax.f32 %v313, 0.0
  %v378 = vmax.f32 %v314, 0.0
  %v379 = vmax.f32 %v315, 0.0
  %v380 = vmax.f32 %v316, 0.0
  %v381 = vmax.f32 %v317, 0.0
  %v382 = vmax.f32 %v318, 0.0
  %v383 = vmax.f32 %v319, 0.0
  %v384 = vmax.f32 %v320, 0.0
  %v385 = vmax.f32 %v321, 0.0
  %v386 = vmax.f32 %v322, 0.0
  %v387 = vmax.f32 %v323, 0.0
  %v388 = vmax.f32 %v324, 0.0
  %v389 = vmax.f32 %v325, 0.0
  %v390 = vmax.f32 %v326, 0.0
  %v391 = vmax.f32 %v327, 0.0
  %v392 = vmax.f32 %v328, 0.0
  %v393 = vmax.f32 %v329, 0.0
  %v394 = vmax.f32 %v330, 0.0
  %v395 = vmax.f32 %v331, 0.0
  %v396 = vmax.f32 %v332, 0.0
  %v397 = vmax.f32 %v333, 0.0
  %v398 = vpack.c.bf16 %v336, %v334
  %v399 = vpack.c.bf16 %v337, %v335
  %v400 = vpack.c.bf16 %v340, %v338
  %v401 = vpack.c.bf16 %v341, %v339
  %v402 = vpack.c.bf16 %v344, %v342
  %v403 = vpack.c.bf16 %v345, %v343
  %v404 = vpack.c.bf16 %v348, %v346
  %v405 = vpack.c.bf16 %v349, %v347
  %v406 = vpack.c.bf16 %v352, %v350
  %v407 = vpack.c.bf16 %v353, %v351
  %v408 = vpack.c.bf16 %v356, %v354
  %v409 = vpack.c.bf16 %v357, %v355
  %v410 = vpack.c.bf16 %v360, %v358
  %v411 = vpack.c.bf16 %v361, %v359
  %v412 = vpack.c.bf16 %v364, %v362
  %v413 = vpack.c.bf16 %v365, %v363
  %v414 = vpack.c.bf16 %v368, %v366
  %v415 = vpack.c.bf16 %v369, %v367
  %v416 = vpack.c.bf16 %v372, %v370
  %v417 = vpack.c.bf16 %v373, %v371
  %v418 = vpack.c.bf16 %v376, %v374
  %v419 = vpack.c.bf16 %v377, %v375
  %v420 = vpack.c.bf16 %v380, %v378
  %v421 = vpack.c.bf16 %v381, %v379
  %v422 = vpack.c.bf16 %v384, %v382
  %v423 = vpack.c.bf16 %v385, %v383
  %v424 = vpack.c.bf16 %v388, %v386
  %v425 = vpack.c.bf16 %v389, %v387
  %v426 = vpack.c.bf16 %v392, %v390
  %v427 = vpack.c.bf16 %v393, %v391
  %v428 = vpack.c.bf16 %v396, %v394
  %v429 = vpack.c.bf16 %v397, %v395
  %v430 = vadd.f32 %v142, 256.0
  %v431 = vadd.f32 %v143, 256.0
  %v432 = vadd.f32 %v144, 256.0
  %v433 = vadd.f32 %v145, 256.0
  %v434 = vadd.f32 %v146, 256.0
  %v435 = vadd.f32 %v147, 256.0
  %v436 = vadd.f32 %v148, 256.0
  %v437 = vadd.f32 %v149, 256.0
  %v438 = vadd.f32 %v150, 256.0
  %v439 = vadd.f32 %v151, 256.0
  %v440 = vadd.f32 %v152, 256.0
  %v441 = vadd.f32 %v153, 256.0
  %v442 = vadd.f32 %v154, 256.0
  %v443 = vadd.f32 %v155, 256.0
  %v444 = vadd.f32 %v156, 256.0
  %v445 = vadd.f32 %v157, 256.0
  %v446 = vadd.f32 %v158, 256.0
  %v447 = vadd.f32 %v159, 256.0
  %v448 = vadd.f32 %v160, 256.0
  %v449 = vadd.f32 %v161, 256.0
  %v450 = vadd.f32 %v162, 256.0
  %v451 = vadd.f32 %v163, 256.0
  %v452 = vadd.f32 %v164, 256.0
  %v453 = vadd.f32 %v165, 256.0
  %v454 = vadd.f32 %v166, 256.0
  %v455 = vadd.f32 %v167, 256.0
  %v456 = vadd.f32 %v168, 256.0
  %v457 = vadd.f32 %v169, 256.0
  %v458 = vadd.f32 %v170, 256.0
  %v459 = vadd.f32 %v171, 256.0
  %v460 = vadd.f32 %v172, 256.0
  %v461 = vadd.f32 %v173, 256.0
  %v462 = vadd.f32 %v174, 256.0
  %v463 = vadd.f32 %v175, 256.0
  %v464 = vadd.f32 %v176, 256.0
  %v465 = vadd.f32 %v177, 256.0
  %v466 = vadd.f32 %v178, 256.0
  %v467 = vadd.f32 %v179, 256.0
  %v468 = vadd.f32 %v180, 256.0
  %v469 = vadd.f32 %v181, 256.0
  %v470 = vadd.f32 %v182, 256.0
  %v471 = vadd.f32 %v183, 256.0
  %v472 = vadd.f32 %v184, 256.0
  %v473 = vadd.f32 %v185, 256.0
  %v474 = vadd.f32 %v186, 256.0
  %v475 = vadd.f32 %v187, 256.0
  %v476 = vadd.f32 %v188, 256.0
  %v477 = vadd.f32 %v189, 256.0
  %v478 = vadd.f32 %v190, 256.0
  %v479 = vadd.f32 %v191, 256.0
  %v480 = vadd.f32 %v192, 256.0
  %v481 = vadd.f32 %v193, 256.0
  %v482 = vadd.f32 %v194, 256.0
  %v483 = vadd.f32 %v195, 256.0
  %v484 = vadd.f32 %v196, 256.0
  %v485 = vadd.f32 %v197, 256.0
  %v486 = vadd.f32 %v198, 256.0
  %v487 = vadd.f32 %v199, 256.0
  %v488 = vadd.f32 %v200, 256.0
  %v489 = vadd.f32 %v201, 256.0
  %v490 = vadd.f32 %v202, 256.0
  %v491 = vadd.f32 %v203, 256.0
  %v492 = vadd.f32 %v204, 256.0
  %v493 = vadd.f32 %v205, 256.0
  %v494 = vand.u32 2147483647, %v430
  %v495 = vand.u32 2147483647, %v431
  %v496 = vand.u32 2147483647, %v432
  %v497 = vand.u32 2147483647, %v433
  %v498 = vand.u32 2147483647, %v434
  %v499 = vand.u32 2147483647, %v435
  %v500 = vand.u32 2147483647, %v436
  %v501 = vand.u32 2147483647, %v437
  %v502 = vand.u32 2147483647, %v438
  %v503 = vand.u32 2147483647, %v439
  %v504 = vand.u32 2147483647, %v440
  %v505 = vand.u32 2147483647, %v441
  %v506 = vand.u32 2147483647, %v442
  %v507 = vand.u32 2147483647, %v443
  %v508 = vand.u32 2147483647, %v444
  %v509 = vand.u32 2147483647, %v445
  %v510 = vand.u32 2147483647, %v446
  %v511 = vand.u32 2147483647, %v447
  %v512 = vand.u32 2147483647, %v448
  %v513 = vand.u32 2147483647, %v449
  %v514 = vand.u32 2147483647, %v450
  %v515 = vand.u32 2147483647, %v451
  %v516 = vand.u32 2147483647, %v452
  %v517 = vand.u32 2147483647, %v453
  %v518 = vand.u32 2147483647, %v454
  %v519 = vand.u32 2147483647, %v455
  %v520 = vand.u32 2147483647, %v456
  %v521 = vand.u32 2147483647, %v457
  %v522 = vand.u32 2147483647, %v458
  %v523 = vand.u32 2147483647, %v459
  %v524 = vand.u32 2147483647, %v460
  %v525 = vand.u32 2147483647, %v461
  %v526 = vand.u32 2147483647, %v462
  %v527 = vand.u32 2147483647, %v463
  %v528 = vand.u32 2147483647, %v464
  %v529 = vand.u32 2147483647, %v465
  %v530 = vand.u32 2147483647, %v466
  %v531 = vand.u32 2147483647, %v467
  %v532 = vand.u32 2147483647, %v468
  %v533 = vand.u32 2147483647, %v469
  %v534 = vand.u32 2147483647, %v470
  %v535 = vand.u32 2147483647, %v471
  %v536 = vand.u32 2147483647, %v472
  %v537 = vand.u32 2147483647, %v473
  %v538 = vand.u32 2147483647, %v474
  %v539 = vand.u32 2147483647, %v475
  %v540 = vand.u32 2147483647, %v476
  %v541 = vand.u32 2147483647, %v477
  %v542 = vand.u32 2147483647, %v478
  %v543 = vand.u32 2147483647, %v479
  %v544 = vand.u32 2147483647, %v480
  %v545 = vand.u32 2147483647, %v481
  %v546 = vand.u32 2147483647, %v482
  %v547 = vand.u32 2147483647, %v483
  %v548 = vand.u32 2147483647, %v484
  %v549 = vand.u32 2147483647, %v485
  %v550 = vand.u32 2147483647, %v486
  %v551 = vand.u32 2147483647, %v487
  %v552 = vand.u32 2147483647, %v488
  %v553 = vand.u32 2147483647, %v489
  %v554 = vand.u32 2147483647, %v490
  %v555 = vand.u32 2147483647, %v491
  %v556 = vand.u32 2147483647, %v492
  %v557 = vand.u32 2147483647, %v493
  %v558 = vsub.f32 1.0, %v494
  %v559 = vsub.f32 1.0, %v495
  %v560 = vsub.f32 1.0, %v496
  %v561 = vsub.f32 1.0, %v497
  %v562 = vsub.f32 1.0, %v498
  %v563 = vsub.f32 1.0, %v499
  %v564 = vsub.f32 1.0, %v500
  %v565 = vsub.f32 1.0, %v501
  %v566 = vsub.f32 1.0, %v502
  %v567 = vsub.f32 1.0, %v503
  %v568 = vsub.f32 1.0, %v504
  %v569 = vsub.f32 1.0, %v505
  %v570 = vsub.f32 1.0, %v506
  %v571 = vsub.f32 1.0, %v507
  %v572 = vsub.f32 1.0, %v508
  %v573 = vsub.f32 1.0, %v509
  %v574 = vsub.f32 1.0, %v510
  %v575 = vsub.f32 1.0, %v511
  %v576 = vsub.f32 1.0, %v512
  %v577 = vsub.f32 1.0, %v513
  %v578 = vsub.f32 1.0, %v514
  %v579 = vsub.f32 1.0, %v515
  %v580 = vsub.f32 1.0, %v516
  %v581 = vsub.f32 1.0, %v517
  %v582 = vsub.f32 1.0, %v518
  %v583 = vsub.f32 1.0, %v519
  %v584 = vsub.f32 1.0, %v520
  %v585 = vsub.f32 1.0, %v521
  %v586 = vsub.f32 1.0, %v522
  %v587 = vsub.f32 1.0, %v523
  %v588 = vsub.f32 1.0, %v524
  %v589 = vsub.f32 1.0, %v525
  %v590 = vsub.f32 1.0, %v526
  %v591 = vsub.f32 1.0, %v527
  %v592 = vsub.f32 1.0, %v528
  %v593 = vsub.f32 1.0, %v529
  %v594 = vsub.f32 1.0, %v530
  %v595 = vsub.f32 1.0, %v531
  %v596 = vsub.f32 1.0, %v532
  %v597 = vsub.f32 1.0, %v533
  %v598 = vsub.f32 1.0, %v534
  %v599 = vsub.f32 1.0, %v535
  %v600 = vsub.f32 1.0, %v536
  %v601 = vsub.f32 1.0, %v537
  %v602 = vsub.f32 1.0, %v538
  %v603 = vsub.f32 1.0, %v539
  %v604 = vsub.f32 1.0, %v540
  %v605 = vsub.f32 1.0, %v541
  %v606 = vsub.f32 1.0, %v542
  %v607 = vsub.f32 1.0, %v543
  %v608 = vsub.f32 1.0, %v544
  %v609 = vsub.f32 1.0, %v545
  %v610 = vsub.f32 1.0, %v546
  %v611 = vsub.f32 1.0, %v547
  %v612 = vsub.f32 1.0, %v548
  %v613 = vsub.f32 1.0, %v549
  %v614 = vsub.f32 1.0, %v550
  %v615 = vsub.f32 1.0, %v551
  %v616 = vsub.f32 1.0, %v552
  %v617 = vsub.f32 1.0, %v553
  %v618 = vsub.f32 1.0, %v554
  %v619 = vsub.f32 1.0, %v555
  %v620 = vsub.f32 1.0, %v556
  %v621 = vsub.f32 1.0, %v557
  %v622 = vmax.f32 %v558, 0.0
  %v623 = vmax.f32 %v559, 0.0
  %v624 = vmax.f32 %v560, 0.0
  %v625 = vmax.f32 %v561, 0.0
  %v626 = vmax.f32 %v562, 0.0
  %v627 = vmax.f32 %v563, 0.0
  %v628 = vmax.f32 %v564, 0.0
  %v629 = vmax.f32 %v565, 0.0
  %v630 = vmax.f32 %v566, 0.0
  %v631 = vmax.f32 %v567, 0.0
  %v632 = vmax.f32 %v568, 0.0
  %v633 = vmax.f32 %v569, 0.0
  %v634 = vmax.f32 %v570, 0.0
  %v635 = vmax.f32 %v571, 0.0
  %v636 = vmax.f32 %v572, 0.0
  %v637 = vmax.f32 %v573, 0.0
  %v638 = vmax.f32 %v574, 0.0
  %v639 = vmax.f32 %v575, 0.0
  %v640 = vmax.f32 %v576, 0.0
  %v641 = vmax.f32 %v577, 0.0
  %v642 = vmax.f32 %v578, 0.0
  %v643 = vmax.f32 %v579, 0.0
  %v644 = vmax.f32 %v580, 0.0
  %v645 = vmax.f32 %v581, 0.0
  %v646 = vmax.f32 %v582, 0.0
  %v647 = vmax.f32 %v583, 0.0
  %v648 = vmax.f32 %v584, 0.0
  %v649 = vmax.f32 %v585, 0.0
  %v650 = vmax.f32 %v586, 0.0
  %v651 = vmax.f32 %v587, 0.0
  %v652 = vmax.f32 %v588, 0.0
  %v653 = vmax.f32 %v589, 0.0
  %v654 = vmax.f32 %v590, 0.0
  %v655 = vmax.f32 %v591, 0.0
  %v656 = vmax.f32 %v592, 0.0
  %v657 = vmax.f32 %v593, 0.0
  %v658 = vmax.f32 %v594, 0.0
  %v659 = vmax.f32 %v595, 0.0
  %v660 = vmax.f32 %v596, 0.0
  %v661 = vmax.f32 %v597, 0.0
  %v662 = vmax.f32 %v598, 0.0
  %v663 = vmax.f32 %v599, 0.0
  %v664 = vmax.f32 %v600, 0.0
  %v665 = vmax.f32 %v601, 0.0
  %v666 = vmax.f32 %v602, 0.0
  %v667 = vmax.f32 %v603, 0.0
  %v668 = vmax.f32 %v604, 0.0
  %v669 = vmax.f32 %v605, 0.0
  %v670 = vmax.f32 %v606, 0.0
  %v671 = vmax.f32 %v607, 0.0
  %v672 = vmax.f32 %v608, 0.0
  %v673 = vmax.f32 %v609, 0.0
  %v674 = vmax.f32 %v610, 0.0
  %v675 = vmax.f32 %v611, 0.0
  %v676 = vmax.f32 %v612, 0.0
  %v677 = vmax.f32 %v613, 0.0
  %v678 = vmax.f32 %v614, 0.0
  %v679 = vmax.f32 %v615, 0.0
  %v680 = vmax.f32 %v616, 0.0
  %v681 = vmax.f32 %v617, 0.0
  %v682 = vmax.f32 %v618, 0.0
  %v683 = vmax.f32 %v619, 0.0
  %v684 = vmax.f32 %v620, 0.0
  %v685 = vmax.f32 %v621, 0.0
  %v686 = vpack.c.bf16 %v624, %v622
  %v687 = vpack.c.bf16 %v625, %v623
  %v688 = vpack.c.bf16 %v628, %v626
  %v689 = vpack.c.bf16 %v629, %v627
  %v690 = vpack.c.bf16 %v632, %v630
  %v691 = vpack.c.bf16 %v633, %v631
  %v692 = vpack.c.bf16 %v636, %v634
  %v693 = vpack.c.bf16 %v637, %v635
  %v694 = vpack.c.bf16 %v640, %v638
  %v695 = vpack.c.bf16 %v641, %v639
  %v696 = vpack.c.bf16 %v644, %v642
  %v697 = vpack.c.bf16 %v645, %v643
  %v698 = vpack.c.bf16 %v648, %v646
  %v699 = vpack.c.bf16 %v649, %v647
  %v700 = vpack.c.bf16 %v652, %v650
  %v701 = vpack.c.bf16 %v653, %v651
  %v702 = vpack.c.bf16 %v656, %v654
  %v703 = vpack.c.bf16 %v657, %v655
  %v704 = vpack.c.bf16 %v660, %v658
  %v705 = vpack.c.bf16 %v661, %v659
  %v706 = vpack.c.bf16 %v664, %v662
  %v707 = vpack.c.bf16 %v665, %v663
  %v708 = vpack.c.bf16 %v668, %v666
  %v709 = vpack.c.bf16 %v669, %v667
  %v710 = vpack.c.bf16 %v672, %v670
  %v711 = vpack.c.bf16 %v673, %v671
  %v712 = vpack.c.bf16 %v676, %v674
  %v713 = vpack.c.bf16 %v677, %v675
  %v714 = vpack.c.bf16 %v680, %v678
  %v715 = vpack.c.bf16 %v681, %v679
  %v716 = vpack.c.bf16 %v684, %v682
  %v717 = vpack.c.bf16 %v685, %v683
  %v718 = vld [vmem:[%s52] sm:$0xff]
  %v719 = vld [vmem:[%s52 + $0x8] sm:$0xff]
  %v720 = vpack.c.bf16 %v718, %v718
  %v721 = vpack.c.bf16 %v719, %v719
  %v722 = vld [vmem:[%s61] sm:$0xff]
  %v723 = vld [vmem:[%s61 + $0x8] sm:$0xff]
  %v724 = vpack.c.bf16 %v722, %v722
  %v725 = vpack.c.bf16 %v723, %v723
  %726 = vmatprep.subr.bf16.mxu0 %v687
  %727 = vmatpush1.bf16.msra.mxu0 %v686
  %728 = vmatprep.subr.bf16.mxu0 %v689
  %729 = vmatpush1.bf16.msra.mxu0 %v688
  %730 = vmatprep.subr.bf16.mxu0 %v691
  %731 = vmatpush1.bf16.msra.mxu0 %v690
  %732 = vmatprep.subr.bf16.mxu0 %v693
  %733 = vmatpush1.bf16.msra.mxu0 %v692
  %734 = vmatprep.subr.bf16.mxu0 %v695
  %735 = vmatpush1.bf16.msra.mxu0 %v694
  %736 = vmatprep.subr.bf16.mxu0 %v697
  %737 = vmatpush1.bf16.msra.mxu0 %v696
  %738 = vmatprep.subr.bf16.mxu0 %v699
  %739 = vmatpush1.bf16.msra.mxu0 %v698
  %740 = vmatprep.subr.bf16.mxu0 %v701
  %741 = vmatpush1.bf16.msra.mxu0 %v700
  %742 = vmatprep.subr.bf16.mxu0 %v703
  %743 = vmatpush1.bf16.msra.mxu0 %v702
  %744 = vmatprep.subr.bf16.mxu0 %v705
  %745 = vmatpush1.bf16.msra.mxu0 %v704
  %746 = vmatprep.subr.bf16.mxu0 %v707
  %747 = vmatpush1.bf16.msra.mxu0 %v706
  %748 = vmatprep.subr.bf16.mxu0 %v709
  %749 = vmatpush1.bf16.msra.mxu0 %v708
  %750 = vmatprep.subr.bf16.mxu0 %v711
  %751 = vmatpush1.bf16.msra.mxu0 %v710
  %752 = vmatprep.subr.bf16.mxu0 %v713
  %753 = vmatpush1.bf16.msra.mxu0 %v712
  %754 = vmatprep.subr.bf16.mxu0 %v715
  %755 = vmatpush1.bf16.msra.mxu0 %v714
  %756 = vmatprep.subr.bf16.mxu0 %v717
  %757 = vmatpush1.bf16.msra.mxu0 %v716
  %758 = vmatprep.mubr.bf16.mxu0 %v725
  %759 = vmatmul.mubr.bf16.gmra.mrb[0].mxu0 %v724
  %v760 = vpop.f32.mrb[0].mxu0
  %v761 = vadd.f32 0.0, %v760
  %v762 = vpop.f32.mrb[0].mxu0
  %v763 = vadd.f32 0.0, %v762
  %v764 = vpop.f32.mrb[0].mxu0
  %v765 = vpop.f32.mrb[0].mxu0
  %766 = vdwg.mxu0
  %767 = vmatprep.subr.bf16.mxu0 %v399
  %768 = vmatpush1.bf16.msra.mxu0 %v398
  %769 = vmatprep.subr.bf16.mxu0 %v401
  %770 = vmatpush1.bf16.msra.mxu0 %v400
  %771 = vmatprep.subr.bf16.mxu0 %v403
  %772 = vmatpush1.bf16.msra.mxu0 %v402
  %773 = vmatprep.subr.bf16.mxu0 %v405
  %774 = vmatpush1.bf16.msra.mxu0 %v404
  %775 = vmatprep.subr.bf16.mxu0 %v407
  %776 = vmatpush1.bf16.msra.mxu0 %v406
  %777 = vmatprep.subr.bf16.mxu0 %v409
  %778 = vmatpush1.bf16.msra.mxu0 %v408
  %779 = vmatprep.subr.bf16.mxu0 %v411
  %780 = vmatpush1.bf16.msra.mxu0 %v410
  %781 = vmatprep.subr.bf16.mxu0 %v413
  %782 = vmatpush1.bf16.msra.mxu0 %v412
  %783 = vmatprep.subr.bf16.mxu0 %v415
  %784 = vmatpush1.bf16.msra.mxu0 %v414
  %785 = vmatprep.subr.bf16.mxu0 %v417
  %786 = vmatpush1.bf16.msra.mxu0 %v416
  %787 = vmatprep.subr.bf16.mxu0 %v419
  %788 = vmatpush1.bf16.msra.mxu0 %v418
  %789 = vmatprep.subr.bf16.mxu0 %v421
  %790 = vmatpush1.bf16.msra.mxu0 %v420
  %791 = vmatprep.subr.bf16.mxu0 %v423
  %792 = vmatpush1.bf16.msra.mxu0 %v422
  %793 = vmatprep.subr.bf16.mxu0 %v425
  %794 = vmatpush1.bf16.msra.mxu0 %v424
  %795 = vmatprep.subr.bf16.mxu0 %v427
  %796 = vmatpush1.bf16.msra.mxu0 %v426
  %797 = vmatprep.subr.bf16.mxu0 %v429
  %798 = vmatpush1.bf16.msra.mxu0 %v428
  %799 = vmatprep.mubr.bf16.mxu0 %v721
  %800 = vmatmul.mubr.bf16.gmra.mrb[0].mxu0 %v720
  %v801 = vpop.f32.mrb[0].mxu0
  %v802 = vadd.f32 %v761, %v801
  %v803 = vpop.f32.mrb[0].mxu0
  %v804 = vadd.f32 %v763, %v803
  %v805 = vpop.f32.mrb[0].mxu0
  %v806 = vpop.f32.mrb[0].mxu0
  %807 = vdwg.mxu0
  %808 = vst [vmem:[%s4] sm:$0xff] %v802
  %809 = vst [vmem:[%s4 + $0x8] sm:$0xff] %v804
  // Predicated region
  $region14: #{random_resized_crop_1d.1} parent=0 // pred_check
    _
  $region15: #{random_resized_crop_1d.1} parent=0 // pred_check_branch
    %811 = sbr.rel (0) target = $region17
  $region16: #{random_resized_crop_1d.1} parent=0 // pred_region
    _
  $region17: #{random_resized_crop_1d.1} parent=0 // pred_fallthru
    _
  // Predicated region
  $region18: #{random_resized_crop_1d.1} parent=0 // pred_check
    _
  $region19: #{random_resized_crop_1d.1} parent=0 // pred_check_branch
    %813 = sbr.rel (0) target = $region21
  $region20: #{random_resized_crop_1d.1} parent=0 // pred_region
    _
  $region21: #{random_resized_crop_1d.1} parent=0 // pred_fallthru
    _

</llo_original>
